<compile_context>
chip_gen: v5e
topology: v5e:2x2
jax: 0.10.0
libtpu: 0.0.40
codegen_flags: <defaults>
</compile_context>

<pallas_src>
import functools
import math

import jax
import jax.numpy as jnp
from jax.experimental import pallas as pl
from jax.experimental.pallas import tpu as pltpu

BN_EPS = 1e-5
LANE = 128


def _round_up(x, m):
    return ((x + m - 1) // m) * m


def _pick_vmem_limit():
    # v5e/v6e have 128 MiB physical VMEM -> raise the scoped limit; v7x (64 MiB)
    # and unknown chips stay at the conservative 32 MiB (plenty for these tiles).
    try:
        cap = getattr(pltpu.get_tpu_info(), "vmem_capacity_bytes", 0)
        if cap and cap >= 128 * 1024 * 1024:
            return 64 * 1024 * 1024
    except Exception:
        pass
    return 32 * 1024 * 1024


VMEM_LIMIT = _pick_vmem_limit()


def _batch_tile(batch, cap=8):
    bt = min(batch, cap)
    while batch % bt:
        bt -= 1
    return bt


# ---------------------------------------------------------------------------
# Pallas kernel: conv (per-tap matmuls, batch folded into M) + BN shift
#                (+ residual) (+ ReLU) (+ fused avg-pool + linear head)
# ---------------------------------------------------------------------------
def _conv_bn_kernel(*refs, kh, kw, stride, oh, ow, bt, relu, has_res, has_head):
    it = iter(refs)
    x_ref = next(it)          # (bt, nph, hs, ws, cin_p) bf16
    w_ref = next(it)          # (kh*kw, cin_p, cout_p) bf16, BN scale pre-folded
    shift_ref = next(it)      # (1, cout_p) f32
    res_ref = next(it) if has_res else None     # (bt, oh*ow, cout_p) bf16
    if has_head:
        lw_ref = next(it)     # (cout_p, out_p) f32
        lb_ref = next(it)     # (1, out_p) f32
    o_ref = next(it)

    s = stride
    cin_p = x_ref.shape[-1]
    cout_p = w_ref.shape[-1]
    m = bt * oh * ow

    acc = jnp.zeros((m, cout_p), jnp.float32)
    for ky in range(kh):
        for kx in range(kw):
            p = (ky % s) * s + (kx % s)                       # stride phase
            win = x_ref[:, p, ky // s:ky // s + oh, kx // s:kx // s + ow, :]
            acc = acc + jnp.dot(win.reshape(m, cin_p), w_ref[ky * kw + kx],
                                preferred_element_type=jnp.float32)

    acc = acc + shift_ref[...]            # folded BN (+conv bias); scale is in W
    out = acc.reshape(bt, oh * ow, cout_p)
    if has_res:
        out = out + res_ref[...].astype(jnp.float32)
    if relu:
        out = jnp.maximum(out, 0.0)

    if has_head:
        # AdaptiveAvgPool2d((1,1)) + Flatten + Linear, fused into the epilogue.
        pooled = jnp.mean(out, axis=1)                         # (bt, cout_p)
        o_ref[...] = (jnp.dot(pooled, lw_ref[...],
                              preferred_element_type=jnp.float32) + lb_ref[...])
    else:
        o_ref[...] = out.astype(o_ref.dtype)


# ---------------------------------------------------------------------------
# Wrappers
# ---------------------------------------------------------------------------
def _to_phases(xp, s):
    """(B, Hp, Wp, C) padded input -> (B, s*s, ceil(Hp/s), ceil(Wp/s), C).

    Pure relayout (space-to-batch by stride): same total bytes; lets the kernel
    read every conv tap with a static slice even when s > 1.
    """
    if s == 1:
        return xp[:, None]
    B, Hp, Wp, C = xp.shape
    Hs, Ws = _round_up(Hp, s), _round_up(Wp, s)
    if (Hs, Ws) != (Hp, Wp):
        xp = jnp.pad(xp, ((0, 0), (0, Hs - Hp), (0, Ws - Wp), (0, 0)))
    x = xp.reshape(B, Hs // s, s, Ws // s, s, C)
    x = jnp.transpose(x, (0, 2, 4, 1, 3, 5))
    return x.reshape(B, s * s, Hs // s, Ws // s, C)


def conv_bn(x_flat, hw, conv_w, conv_b, bn, stride, pad, relu=False,
            residual=None, head=None):
    """One fused Pallas call: conv -> folded BN -> [+residual] -> [ReLU] [-> head].

    x_flat: (B, H*W, cin_p) bf16 activations (channels zero-padded to 128; the
            stem may pass the raw 3-channel image).
    hw:     (H, W) spatial dims of x_flat.
    conv_w: PyTorch OIHW f32; conv_b: (cout,); bn = (gamma, beta, mean, var).
    residual: (B, oh*ow, cout_p) bf16 or None.
    head:   None, or (linear_w (cout, out_dim), linear_b) -- fuses avg-pool +
            flatten + linear; the return is then ((B, out_dim) f32, (oh, ow)).
    Returns (y, (oh, ow)) where y is (B, oh*ow, cout_p) bf16 (or logits).
    """
    cout, cin, kh, kw = conv_w.shape
    B = x_flat.shape[0]
    H, W = hw
    cin_have = x_flat.shape[-1]
    cout_p = _round_up(cout, LANE)

    # Fold conv bias + BN (inference) into scale/shift; scale goes into the weights.
    gamma, beta, mean, var = bn
    scale = gamma / jnp.sqrt(var + BN_EPS)
    shift = beta + (conv_b - mean) * scale
    shift_p = jnp.pad(shift, (0, cout_p - cout))[None, :].astype(jnp.float32)
    w_hwio = jnp.transpose(conv_w, (2, 3, 1, 0)) * scale[None, None, None, :]

    oh = (H + 2 * pad - kh) // stride + 1
    ow = (W + 2 * pad - kw) // stride + 1
    npix = oh * ow

    use_im2col = (kh * kw > 1) and (cin <= 16)   # stem path: deep-K single matmul

    if kh == 1 and kw == 1:
        # 1x1 conv == dense matmul; flatten spatial into M (subsample if strided).
        assert pad == 0
        if stride > 1:
            x4 = x_flat.reshape(B, H, W, cin_have)[:, ::stride, ::stride, :]
            xk = x4.reshape(B, 1, 1, npix, cin_have)
        else:
            xk = x_flat.reshape(B, 1, 1, npix, cin_have)
        k_p = cin_have
        wmat = jnp.pad(w_hwio.reshape(cin, cout),
                       ((0, k_p - cin), (0, cout_p - cout)))[None]
        kkh = kkw = kst = koh = 1
        kow = npix
    elif use_im2col:
        # Stem: wrapper-side im2col -> one matmul with K = kh*kw*cin (147 -> 256).
        kwc = kh * kw * cin
        k_p = _round_up(kwc, LANE)
        x4 = x_flat.reshape(B, H, W, cin_have)[..., :cin]
        xp = jnp.pad(x4, ((0, 0), (pad, pad), (pad, pad), (0, 0)))
        cols = []
        for ky in range(kh):
            for kx in range(kw):
                cols.append(xp[:, ky:ky + stride * (oh - 1) + 1:stride,
                               kx:kx + stride * (ow - 1) + 1:stride, :])
        patches = jnp.concatenate(cols, axis=-1).reshape(B, 1, 1, npix, kwc)
        xk = jnp.pad(patches, ((0, 0),) * 4 + ((0, k_p - kwc),))
        wmat = jnp.pad(w_hwio.reshape(kwc, cout),
                       ((0, k_p - kwc), (0, cout_p - cout)))[None]
        kkh = kkw = kst = koh = 1
        kow = npix
    else:
        # General KxK conv: spatial zero-pad + stride-phase decomposition;
        # the kernel slices the phase ref per tap.
        k_p = cin_have
        x4 = x_flat.reshape(B, H, W, cin_have)
        xp = jnp.pad(x4, ((0, 0), (pad, pad), (pad, pad), (0, 0))) if pad else x4
        xk = _to_phases(xp, stride)
        wmat = jnp.pad(w_hwio.reshape(kh * kw, cin, cout),
                       ((0, 0), (0, k_p - cin), (0, cout_p - cout)))
        kkh, kkw, kst = kh, kw, stride
        koh, kow = oh, ow

    xk = xk.astype(jnp.bfloat16)
    wmat = wmat.astype(jnp.bfloat16)
    nph, hs, ws = xk.shape[1], xk.shape[2], xk.shape[3]

    bt = _batch_tile(B)
    grid = (B // bt,)

    kernel = functools.partial(_conv_bn_kernel, kh=kkh, kw=kkw, stride=kst,
                               oh=koh, ow=kow, bt=bt, relu=relu,
                               has_res=residual is not None,
                               has_head=head is not None)

    in_specs = [
        pl.BlockSpec((bt, nph, hs, ws, k_p), lambda b: (b, 0, 0, 0, 0)),
        pl.BlockSpec(wmat.shape, lambda b: (0, 0, 0)),
        pl.BlockSpec((1, cout_p), lambda b: (0, 0)),
    ]
    args = [xk, wmat, shift_p]

    if residual is not None:
        assert residual.shape == (B, npix, cout_p), (residual.shape, (B, npix, cout_p))
        in_specs.append(pl.BlockSpec((bt, npix, cout_p), lambda b: (b, 0, 0)))
        args.append(residual.astype(jnp.bfloat16))

    if head is not None:
        lw, lb = head
        out_dim = lw.shape[-1]
        out_p = _round_up(out_dim, LANE)
        lwp = jnp.pad(lw.astype(jnp.float32),
                      ((0, cout_p - lw.shape[0]), (0, out_p - out_dim)))
        lbp = jnp.pad(jnp.reshape(lb, (1, -1)).astype(jnp.float32),
                      ((0, 0), (0, out_p - out_dim)))
        in_specs += [pl.BlockSpec((cout_p, out_p), lambda b: (0, 0)),
                     pl.BlockSpec((1, out_p), lambda b: (0, 0))]
        args += [lwp, lbp]
        out_shape = jax.ShapeDtypeStruct((B, out_p), jnp.float32)
        out_spec = pl.BlockSpec((bt, out_p), lambda b: (b, 0))
    else:
        out_shape = jax.ShapeDtypeStruct((B, npix, cout_p), jnp.bfloat16)
        out_spec = pl.BlockSpec((bt, npix, cout_p), lambda b: (b, 0, 0))

    y = pl.pallas_call(
        kernel,
        out_shape=out_shape,
        grid=grid,
        in_specs=in_specs,
        out_specs=out_spec,
        compiler_params=pltpu.CompilerParams(
            dimension_semantics=("parallel",),
            vmem_limit_bytes=VMEM_LIMIT),
    )(*args)

    if head is not None:
        return y[:, :head[0].shape[-1]], (oh, ow)
    return y, (oh, ow)


def residual_block(x, hw, p, head=None):
    stride = p["stride"]
    if p["shortcut"] is None:
        sc = x
    else:
        sp = p["shortcut"]
        sc, _ = conv_bn(x, hw, sp["w"], sp["b"], sp["bn"], stride, 0)
    h, hw1 = conv_bn(x, hw, p["conv1_w"], p["conv1_b"], p["bn1"], stride, 1, relu=True)
    return conv_bn(h, hw1, p["conv2_w"], p["conv2_b"], p["bn2"], 1, 1,
                   relu=True, residual=sc, head=head)


def bottleneck_block(x, hw, p, head=None):
    stride = p["stride"]
    if p["shortcut"] is None:
        sc = x
    else:
        sp = p["shortcut"]
        sc, _ = conv_bn(x, hw, sp["w"], sp["b"], sp["bn"], stride, 0)
    h, hw1 = conv_bn(x, hw, p["conv1_w"], p["conv1_b"], p["bn1"], 1, 0, relu=True)
    h, hw2 = conv_bn(h, hw1, p["conv2_w"], p["conv2_b"], p["bn2"], stride, 1, relu=True)
    return conv_bn(h, hw2, p["conv3_w"], p["conv3_b"], p["bn3"], 1, 0,
                   relu=True, residual=sc, head=head)


# ---------------------------------------------------------------------------
# Deterministic parameter construction (shapes mirror ResNetBase.__init__)
# ---------------------------------------------------------------------------
def init_conv(key, cin, cout, k):
    k1, k2 = jax.random.split(key)
    fan_in = cin * k * k
    w = jax.random.normal(k1, (cout, cin, k, k), jnp.float32) / math.sqrt(fan_in)
    b = 0.01 * jax.random.normal(k2, (cout,), jnp.float32)
    return w, b


def init_bn(key, c):
    k1, k2, k3, k4 = jax.random.split(key, 4)
    gamma = 1.0 + 0.1 * jax.random.normal(k1, (c,), jnp.float32)
    beta = 0.1 * jax.random.normal(k2, (c,), jnp.float32)
    mean = 0.1 * jax.random.normal(k3, (c,), jnp.float32)
    var = 1.0 + 0.1 * jax.random.uniform(k4, (c,), jnp.float32)
    return gamma, beta, mean, var


def init_residual_block(key, cin, cout, stride):
    ks = jax.random.split(key, 6)
    p = {"stride": stride, "bottleneck": False}
    p["conv1_w"], p["conv1_b"] = init_conv(ks[0], cin, cout, 3)
    p["bn1"] = init_bn(ks[1], cout)
    p["conv2_w"], p["conv2_b"] = init_conv(ks[2], cout, cout, 3)
    p["bn2"] = init_bn(ks[3], cout)
    if stride != 1 or cin != cout:
        w, b = init_conv(ks[4], cin, cout, 1)
        p["shortcut"] = {"w": w, "b": b, "bn": init_bn(ks[5], cout)}
    else:
        p["shortcut"] = None
    return p


def init_bottleneck_block(key, cin, cmid, cout, stride):
    ks = jax.random.split(key, 8)
    p = {"stride": stride, "bottleneck": True}
    p["conv1_w"], p["conv1_b"] = init_conv(ks[0], cin, cmid, 1)
    p["bn1"] = init_bn(ks[1], cmid)
    p["conv2_w"], p["conv2_b"] = init_conv(ks[2], cmid, cmid, 3)
    p["bn2"] = init_bn(ks[3], cmid)
    p["conv3_w"], p["conv3_b"] = init_conv(ks[4], cmid, cout, 1)
    p["bn3"] = init_bn(ks[5], cout)
    if stride != 1 or cin != cout:
        w, b = init_conv(ks[6], cin, cout, 1)
        p["shortcut"] = {"w": w, "b": b, "bn": init_bn(ks[7], cout)}
    else:
        p["shortcut"] = None
    return p


def init_resnet_base(key, n_blocks, n_channels, bottlenecks=None,
                     img_channels=3, first_kernel_size=7, output_dim=16):
    first_channel = 64
    assert len(n_blocks) == len(n_channels)
    assert bottlenecks is None or len(bottlenecks) == len(n_channels)
    keys = jax.random.split(key, 4 + sum(n_blocks))
    params = {"first_kernel_size": first_kernel_size}
    params["conv_w"], params["conv_b"] = init_conv(
        keys[0], img_channels, first_channel, first_kernel_size)
    params["bn"] = init_bn(keys[1], first_channel)

    blocks = []
    prev = first_channel
    kidx = 2
    for i, channels in enumerate(n_channels):
        stride = 1 if len(blocks) == 0 else 2
        if bottlenecks is None:
            blocks.append(init_residual_block(keys[kidx], prev, channels, stride))
        else:
            blocks.append(init_bottleneck_block(keys[kidx], prev, bottlenecks[i],
                                                channels, stride))
        kidx += 1
        prev = channels
        for _ in range(n_blocks[i] - 1):
            if bottlenecks is None:
                blocks.append(init_residual_block(keys[kidx], channels, channels, 1))
            else:
                blocks.append(init_bottleneck_block(keys[kidx], channels,
                                                    bottlenecks[i], channels, 1))
            kidx += 1
    params["blocks"] = blocks

    kl1, kl2 = jax.random.split(keys[kidx])
    c_last = n_channels[-1]
    params["linear_w"] = jax.random.normal(
        kl1, (c_last, output_dim), jnp.float32) / math.sqrt(c_last)
    params["linear_b"] = (0.01 * jax.random.normal(
        kl2, (output_dim,), jnp.float32))[None, :]
    return params


# ---------------------------------------------------------------------------
# Forward passes (Pallas + pure-JAX f32 reference for validation)
# ---------------------------------------------------------------------------
def resnet_base_forward(params, x_nchw):
    # PyTorch NCHW input -> flattened NHWC bf16 compute layout.
    x = jnp.transpose(x_nchw, (0, 2, 3, 1)).astype(jnp.bfloat16)
    B, H, W, C = x.shape
    x = x.reshape(B, H * W, C)
    fks = params["first_kernel_size"]
    # x = self.bn(self.conv(x))   (ResNetBase.forward applies no ReLU / maxpool here)
    x, hw = conv_bn(x, (H, W), params["conv_w"], params["conv_b"], params["bn"],
                    stride=2, pad=fks // 2, relu=False)
    blocks = params["blocks"]
    assert blocks, "ResNetBase needs at least one residual block"
    head = (params["linear_w"], params["linear_b"])
    for i, p in enumerate(blocks):
        h = head if i == len(blocks) - 1 else None   # fuse pool+linear into last conv
        if p["bottleneck"]:
            x, hw = bottleneck_block(x, hw, p, head=h)
        else:
            x, hw = residual_block(x, hw, p, head=h)
    return x                                          # (B, output_dim) f32


def _ref_conv_bn(x, conv_w, conv_b, bn, stride, pad, relu=False, residual=None):
    gamma, beta, mean, var = bn
    y = jax.lax.conv_general_dilated(
        x, jnp.transpose(conv_w, (2, 3, 1, 0)),
        window_strides=(stride, stride), padding=((pad, pad), (pad, pad)),
        dimension_numbers=("NHWC", "HWIO", "NHWC"))
    y = y + conv_b[None, None, None, :]
    y = (y - mean) / jnp.sqrt(var + BN_EPS) * gamma + beta
    if residual is not None:
        y = y + residual
    if relu:
        y = jnp.maximum(y, 0.0)
    return y


def resnet_base_reference(params, x_nchw):
    x = jnp.transpose(x_nchw, (0, 2, 3, 1)).astype(jnp.float32)
    fks = params["first_kernel_size"]
    x = _ref_conv_bn(x, params["conv_w"], params["conv_b"], params["bn"], 2, fks // 2)
    for p in params["blocks"]:
        stride = p["stride"]
        if p["shortcut"] is None:
            sc = x
        else:
            sp = p["shortcut"]
            sc = _ref_conv_bn(x, sp["w"], sp["b"], sp["bn"], stride, 0)
        if p["bottleneck"]:
            h = _ref_conv_bn(x, p["conv1_w"], p["conv1_b"], p["bn1"], 1, 0, relu=True)
            h = _ref_conv_bn(h, p["conv2_w"], p["conv2_b"], p["bn2"], stride, 1, relu=True)
            x = _ref_conv_bn(h, p["conv3_w"], p["conv3_b"], p["bn3"], 1, 0,
                             relu=True, residual=sc)
        else:
            h = _ref_conv_bn(x, p["conv1_w"], p["conv1_b"], p["bn1"], stride, 1, relu=True)
            x = _ref_conv_bn(h, p["conv2_w"], p["conv2_b"], p["bn2"], 1, 1,
                             relu=True, residual=sc)
    pooled = jnp.mean(x, axis=(1, 2))
    return pooled @ params["linear_w"] + params["linear_b"]


# ---------------------------------------------------------------------------
if __name__ == "__main__":
    key = jax.random.PRNGKey(0)
    k_x, k_p = jax.random.split(key)

    # Small config: n_blocks=[1, 1], n_channels=[64, 32], bottlenecks=None,
    # img_channels=3, first_kernel_size=7, output_dim=16.
    x = jax.random.normal(k_x, (2, 3, 16, 16), jnp.float32)  # NCHW, like PyTorch
    params = init_resnet_base(k_p, n_blocks=[1, 1], n_channels=[64, 32],
                              bottlenecks=None, img_channels=3,
                              first_kernel_size=7, output_dim=16)

    out = jax.block_until_ready(resnet_base_forward(params, x))
    assert out.shape == (2, 16), out.shape
    assert bool(jnp.all(jnp.isfinite(out)))

    # Per-layer check: stem conv+BN (exercises the wrapper-im2col path alone).
    x_nhwc = jnp.transpose(x, (0, 2, 3, 1))
    stem, stem_hw = conv_bn(x_nhwc.astype(jnp.bfloat16).reshape(2, 16 * 16, 3),
                            (16, 16), params["conv_w"], params["conv_b"],
                            params["bn"], stride=2, pad=3, relu=False)
    stem_ref = _ref_conv_bn(x_nhwc.astype(jnp.float32), params["conv_w"],
                            params["conv_b"], params["bn"], 2, 3)
    stem_np = stem[..., :64].reshape(2, *stem_hw, 64).astype(jnp.float32)
    err_stem = float(jnp.max(jnp.abs(stem_np - stem_ref)) /
                     (jnp.max(jnp.abs(stem_ref)) + 1e-6))
    assert err_stem < 0.05, f"stem mismatch vs reference: rel_err={err_stem}"

    # End-to-end check against a pure-JAX f32 reference (bf16 kernels -> loose tol).
    ref = jax.block_until_ready(resnet_base_reference(params, x))
    rel_err = float(jnp.max(jnp.abs(out - ref)) / (jnp.max(jnp.abs(ref)) + 1e-6))
    assert rel_err < 0.1, f"mismatch vs reference: rel_err={rel_err}"

    print("KERNEL_OK")
</pallas_src>

<mosaic_0001>
module attributes {stable_mosaic.version = 11 : i64} {
  func.func @_conv_bn_kernel(%arg0: i32, %arg1: memref<2x1x1x64x256xbf16, #tpu.memory_space<vmem>>, %arg2: memref<1x256x128xbf16, #tpu.memory_space<vmem>>, %arg3: memref<1x128xf32, #tpu.memory_space<vmem>>, %arg4: memref<2x64x128xbf16, #tpu.memory_space<vmem>>) attributes {dimension_semantics = [#tpu.dimension_semantics<parallel>], iteration_bounds = array<i64: 1>, scalar_prefetch = 0 : i64, scratch_operands = 0 : i64, tpu.core_type = #tpu.core_type<tc>, window_params = [{transform_indices = @transform_0, window_bounds = array<i64: 2, 1, 1, 64, 256>}, {pipeline_mode = #tpu.pipeline_mode<synchronous>, transform_indices = @transform_1, window_bounds = array<i64: 1, 256, 128>}, {pipeline_mode = #tpu.pipeline_mode<synchronous>, transform_indices = @transform_2, window_bounds = array<i64: 1, 128>}, {transform_indices = @transform_3, window_bounds = array<i64: 2, 64, 128>}]} {
    %cst = arith.constant 0.000000e+00 : f32
    %0 = vector.broadcast %cst : f32 to vector<128x128xf32>
    %c0 = arith.constant 0 : index
    %c0_0 = arith.constant 0 : index
    %c0_1 = arith.constant 0 : index
    %c0_2 = arith.constant 0 : index
    %c0_3 = arith.constant 0 : index
    %1 = vector.load %arg1[%c0, %c0_0, %c0_1, %c0_2, %c0_3] : memref<2x1x1x64x256xbf16, #tpu.memory_space<vmem>>, vector<2x1x1x64x256xbf16>
    %2 = vector.shape_cast %1 : vector<2x1x1x64x256xbf16> to vector<2x1x64x256xbf16>
    %3 = vector.shape_cast %2 : vector<2x1x64x256xbf16> to vector<128x256xbf16>
    %c0_4 = arith.constant 0 : index
    %c0_5 = arith.constant 0 : index
    %c0_6 = arith.constant 0 : index
    %4 = vector.load %arg2[%c0_4, %c0_5, %c0_6] : memref<1x256x128xbf16, #tpu.memory_space<vmem>>, vector<1x256x128xbf16>
    %5 = vector.shape_cast %4 : vector<1x256x128xbf16> to vector<256x128xbf16>
    %cst_7 = arith.constant dense<0.000000e+00> : vector<128x128xf32>
    %6 = tpu.matmul %3, %5, %cst_7 {dimension_numbers = #tpu.dot_dimension_numbers<[1], [0], [0], [1], [0, 0, 1, 1], [], []>} : vector<128x256xbf16>, vector<256x128xbf16>, vector<128x128xf32> -> vector<128x128xf32>
    %7 = arith.addf %0, %6 : vector<128x128xf32>
    %c0_8 = arith.constant 0 : index
    %c0_9 = arith.constant 0 : index
    %8 = vector.load %arg3[%c0_8, %c0_9] : memref<1x128xf32, #tpu.memory_space<vmem>>, vector<1x128xf32>
    %9 = vector.broadcast %8 : vector<1x128xf32> to vector<128x128xf32>
    %10 = arith.addf %7, %9 : vector<128x128xf32>
    %11 = vector.shape_cast %10 : vector<128x128xf32> to vector<2x64x128xf32>
    %12 = arith.truncf %11 : vector<2x64x128xf32> to vector<2x64x128xbf16>
    %c0_10 = arith.constant 0 : index
    %c0_11 = arith.constant 0 : index
    %c0_12 = arith.constant 0 : index
    %13 = vector.load %arg4[%c0_10, %c0_11, %c0_12] : memref<2x64x128xbf16, #tpu.memory_space<vmem>>, vector<2x64x128xbf16>
    tpu.vector_store %arg4[%c0_10, %c0_11, %c0_12], %12 {strides = array<i32>} : memref<2x64x128xbf16, #tpu.memory_space<vmem>>, vector<2x64x128xbf16>,
    return
  }
  func.func @transform_0(%arg0: i32) -> (i32, i32, i32, i32, i32) {
    %c0_i32 = arith.constant 0 : i32
    %c0_i32_0 = arith.constant 0 : i32
    %c0_i32_1 = arith.constant 0 : i32
    %c0_i32_2 = arith.constant 0 : i32
    %c0_i32_3 = arith.constant 0 : i32
    return %arg0, %c0_i32, %c0_i32_0, %c0_i32_1, %c0_i32_2 : i32, i32, i32, i32, i32
  }
  func.func @transform_1(%arg0: i32) -> (i32, i32, i32) {
    %c0_i32 = arith.constant 0 : i32
    %c0_i32_0 = arith.constant 0 : i32
    %c0_i32_1 = arith.constant 0 : i32
    %c0_i32_2 = arith.constant 0 : i32
    return %c0_i32, %c0_i32_0, %c0_i32_1 : i32, i32, i32
  }
  func.func @transform_2(%arg0: i32) -> (i32, i32) {
    %c0_i32 = arith.constant 0 : i32
    %c0_i32_0 = arith.constant 0 : i32
    %c0_i32_1 = arith.constant 0 : i32
    return %c0_i32, %c0_i32_0 : i32, i32
  }
  func.func @transform_3(%arg0: i32) -> (i32, i32, i32) {
    %c0_i32 = arith.constant 0 : i32
    %c0_i32_0 = arith.constant 0 : i32
    %c0_i32_1 = arith.constant 0 : i32
    return %arg0, %c0_i32, %c0_i32_0 : i32, i32, i32
  }
}

</mosaic_0001>

<llo_original>
// kernel: tpu_custom_call.1
$region0: #{tpu_custom_call.1}
  #allocation0 [shape = 'u32[]', space=smem, size = 0x4, offset = 0x4, fixed_abs, tag = 'smem constant byte address 0x4 - core index']
  #allocation1 [shape = 'u32[72,128]{1,0:T(1,128)}', space=vmem, size = 0x9000, scoped, tag = 'internal scratch']
  %s0 = inlined_call_operand.hbm [shape: bf16[2,1,1,64,256], index: 0, kind: input, shape index: {}]
  %s1 = inlined_call_operand.hbm [shape: bf16[1,256,128], index: 1, kind: input, shape index: {}]
  %s2 = inlined_call_operand.vmem [shape: f32[1,128], index: 2, kind: input, shape index: {}]
  %s3 = inlined_call_operand.hbm [shape: bf16[2,64,128], index: 3, kind: output, shape index: {}]
  %s4 = sld [smem:[#allocation0]]
  $region30: #{tpu_custom_call.1} parent=0
    _
  %s6 = ssub.s32 1, %s4
  %s7 = scalar_select 0, %s6, %s4
  $region1: #{tpu_custom_call.1} parent=0
    #allocation2 [shape = 'u8[65536]{0}', space=vmem, size = 0x10000, scoped, tag = 'input window, operand 0, single buffered']
    #allocation3 [shape = 's32[1]{0}', space=sflag, size = 0x4, scoped, tag = 'scoped memory for tpu_custom_call.1']
    #allocation4 [shape = 's32[1]{0}', space=sflag, size = 0x4, scoped, tag = 'scoped memory for tpu_custom_call.1']
    #allocation5 [shape = 'u8[65536]{0}', space=vmem, size = 0x10000, scoped, tag = 'input window, operand 1, single buffered']
    #allocation6 [shape = 's32[1]{0}', space=sflag, size = 0x4, scoped, tag = 'scoped memory for tpu_custom_call.1']
    #allocation7 [shape = 'u8[32768]{0}', space=vmem, size = 0x8000, scoped, tag = 'output window, operand 0, single buffered']
    %8 = vsyncpa [#allocation3], 0
    %9 = vsyncpa [#allocation6], 0
    %10 = vsyncpa [#allocation4], 0
    // Predicated region
    $region2: #{tpu_custom_call.1} parent=1 // pred_check
      _
    $region3: #{tpu_custom_call.1} parent=1 // pred_check_branch
      %12 = sbr.rel (0) target = $region5
    $region4: #{tpu_custom_call.1} parent=1 // pred_region
      %14 = vsyncadd [#allocation3], 0
      %s15 = sshll.u32 %s0, 4
      %s16 = int_to_ptr.hbm [resolvable:$true] %s15
      %s17 = sshll.u32 [#allocation2], 4
      %s18 = int_to_ptr.vmem [resolvable:$true] %s17
      %23 = dma.hbm_to_vmem [thread:$0]  %s16, 2048, %s18, [#allocation3], 128, 128, 8
    $region5: #{tpu_custom_call.1} parent=1 // pred_fallthru
      _
    // Predicated region
    $region6: #{tpu_custom_call.1} parent=1 // pred_check
      _
    $region7: #{tpu_custom_call.1} parent=1 // pred_check_branch
      %25 = sbr.rel (0) target = $region9
    $region8: #{tpu_custom_call.1} parent=1 // pred_region
      %27 = vsyncadd [#allocation6], 0
      %s28 = sshll.u32 %s1, 4
      %s29 = int_to_ptr.hbm [resolvable:$true] %s28
      %s30 = sshll.u32 [#allocation5], 4
      %s31 = int_to_ptr.vmem [resolvable:$true] %s30
      %36 = dma.hbm_to_vmem [thread:$0]  %s29, 2048, %s31, [#allocation6], 64, 64, 4
    $region9: #{tpu_custom_call.1} parent=1 // pred_fallthru
      _
    // Predicated region
    $region10: #{tpu_custom_call.1} parent=1 // pred_check
      _
    $region11: #{tpu_custom_call.1} parent=1 // pred_check_branch
      %38 = sbr.rel (0) target = $region13
    $region12: #{tpu_custom_call.1} parent=1 // pred_region
      _
    $region13: #{tpu_custom_call.1} parent=1 // pred_fallthru
      _
    // Predicated region
    $region14: #{tpu_custom_call.1} parent=1 // pred_check
      _
    $region15: #{tpu_custom_call.1} parent=1 // pred_check_branch
      %40 = sbr.rel (0) target = $region17
    $region16: #{tpu_custom_call.1} parent=1 // pred_region
      %42 = dma.done [#allocation3], 2048
    $region17: #{tpu_custom_call.1} parent=1 // pred_fallthru
      _
    // Predicated region
    $region18: #{tpu_custom_call.1} parent=1 // pred_check
      _
    $region19: #{tpu_custom_call.1} parent=1 // pred_check_branch
      %44 = sbr.rel (0) target = $region21
    $region20: #{tpu_custom_call.1} parent=1 // pred_region
      %46 = dma.done [#allocation6], 2048
    $region21: #{tpu_custom_call.1} parent=1 // pred_fallthru
      _
    %v47 = vld [vmem:[#allocation2] sm:$0xff]
    %v48 = vld [vmem:[#allocation2 + $0x8] sm:$0xff]
    %v49 = vld [vmem:[#allocation2 + $0x10] sm:$0xff]
    %v50 = vld [vmem:[#allocation2 + $0x18] sm:$0xff]
    %v51 = vld [vmem:[#allocation2 + $0x20] sm:$0xff]
    %v52 = vld [vmem:[#allocation2 + $0x28] sm:$0xff]
    %v53 = vld [vmem:[#allocation2 + $0x30] sm:$0xff]
    %v54 = vld [vmem:[#allocation2 + $0x38] sm:$0xff]
    %v55 = vld [vmem:[#allocation2 + $0x40] sm:$0xff]
    %v56 = vld [vmem:[#allocation2 + $0x48] sm:$0xff]
    %v57 = vld [vmem:[#allocation2 + $0x50] sm:$0xff]
    %v58 = vld [vmem:[#allocation2 + $0x58] sm:$0xff]
    %v59 = vld [vmem:[#allocation2 + $0x60] sm:$0xff]
    %v60 = vld [vmem:[#allocation2 + $0x68] sm:$0xff]
    %v61 = vld [vmem:[#allocation2 + $0x70] sm:$0xff]
    %v62 = vld [vmem:[#allocation2 + $0x78] sm:$0xff]
    %v63 = vld [vmem:[#allocation5] sm:$0xf]
    %v64 = vld [vmem:[#allocation5 + $0x4] sm:$0xf]
    %v65 = vld [vmem:[#allocation5 + $0x8] sm:$0xf]
    %v66 = vld [vmem:[#allocation5 + $0xc] sm:$0xf]
    %v67 = vld [vmem:[#allocation5 + $0x10] sm:$0xf]
    %v68 = vld [vmem:[#allocation5 + $0x14] sm:$0xf]
    %v69 = vld [vmem:[#allocation5 + $0x18] sm:$0xf]
    %v70 = vld [vmem:[#allocation5 + $0x1c] sm:$0xf]
    %v71 = vld [vmem:[#allocation5 + $0x20] sm:$0xf]
    %v72 = vld [vmem:[#allocation5 + $0x24] sm:$0xf]
    %v73 = vld [vmem:[#allocation5 + $0x28] sm:$0xf]
    %v74 = vld [vmem:[#allocation5 + $0x2c] sm:$0xf]
    %v75 = vld [vmem:[#allocation5 + $0x30] sm:$0xf]
    %v76 = vld [vmem:[#allocation5 + $0x34] sm:$0xf]
    %v77 = vld [vmem:[#allocation5 + $0x38] sm:$0xf]
    %v78 = vld [vmem:[#allocation5 + $0x3c] sm:$0xf]
    %v79 = vld [vmem:[#allocation5 + $0x40] sm:$0xf]
    %v80 = vld [vmem:[#allocation5 + $0x44] sm:$0xf]
    %v81 = vld [vmem:[#allocation5 + $0x48] sm:$0xf]
    %v82 = vld [vmem:[#allocation5 + $0x4c] sm:$0xf]
    %v83 = vld [vmem:[#allocation5 + $0x50] sm:$0xf]
    %v84 = vld [vmem:[#allocation5 + $0x54] sm:$0xf]
    %v85 = vld [vmem:[#allocation5 + $0x58] sm:$0xf]
    %v86 = vld [vmem:[#allocation5 + $0x5c] sm:$0xf]
    %v87 = vld [vmem:[#allocation5 + $0x60] sm:$0xf]
    %v88 = vld [vmem:[#allocation5 + $0x64] sm:$0xf]
    %v89 = vld [vmem:[#allocation5 + $0x68] sm:$0xf]
    %v90 = vld [vmem:[#allocation5 + $0x6c] sm:$0xf]
    %v91 = vld [vmem:[#allocation5 + $0x70] sm:$0xf]
    %v92 = vld [vmem:[#allocation5 + $0x74] sm:$0xf]
    %v93 = vld [vmem:[#allocation5 + $0x78] sm:$0xf]
    %v94 = vld [vmem:[#allocation5 + $0x7c] sm:$0xf]
    %v95 = vld [vmem:[%s2] sm:$0x1]
    %v97 = vperm.slane %v95, 0
    %v115 = vunpack.c.l.b16 %v47
    %v116 = vunpack.c.h.b16 %v47
    %v117 = vunpack.c.l.b16 %v48
    %v118 = vunpack.c.h.b16 %v48
    %v119 = vunpack.c.l.b16 %v49
    %v120 = vunpack.c.h.b16 %v49
    %v121 = vunpack.c.l.b16 %v50
    %v122 = vunpack.c.h.b16 %v50
    %v123 = vunpack.c.l.b16 %v51
    %v124 = vunpack.c.h.b16 %v51
    %v125 = vunpack.c.l.b16 %v52
    %v126 = vunpack.c.h.b16 %v52
    %v127 = vunpack.c.l.b16 %v53
    %v128 = vunpack.c.h.b16 %v53
    %v129 = vunpack.c.l.b16 %v54
    %v130 = vunpack.c.h.b16 %v54
    %v131 = vunpack.c.l.b16 %v55
    %v132 = vunpack.c.h.b16 %v55
    %v133 = vunpack.c.l.b16 %v56
    %v134 = vunpack.c.h.b16 %v56
    %v135 = vunpack.c.l.b16 %v57
    %v136 = vunpack.c.h.b16 %v57
    %v137 = vunpack.c.l.b16 %v58
    %v138 = vunpack.c.h.b16 %v58
    %v139 = vunpack.c.l.b16 %v59
    %v140 = vunpack.c.h.b16 %v59
    %v141 = vunpack.c.l.b16 %v60
    %v142 = vunpack.c.h.b16 %v60
    %v143 = vunpack.c.l.b16 %v61
    %v144 = vunpack.c.h.b16 %v61
    %v145 = vunpack.c.l.b16 %v62
    %v146 = vunpack.c.h.b16 %v62
    %v147 = vpack.c.b16 %v117, %v115
    %v148 = vpack.c.b16 %v118, %v116
    %v149 = vpack.c.b16 %v121, %v119
    %v150 = vpack.c.b16 %v122, %v120
    %v151 = vpack.c.b16 %v125, %v123
    %v152 = vpack.c.b16 %v126, %v124
    %v153 = vpack.c.b16 %v129, %v127
    %v154 = vpack.c.b16 %v130, %v128
    %v155 = vpack.c.b16 %v133, %v131
    %v156 = vpack.c.b16 %v134, %v132
    %v157 = vpack.c.b16 %v137, %v135
    %v158 = vpack.c.b16 %v138, %v136
    %v159 = vpack.c.b16 %v141, %v139
    %v160 = vpack.c.b16 %v142, %v140
    %v161 = vpack.c.b16 %v145, %v143
    %v162 = vpack.c.b16 %v146, %v144
    %v211 = vunpack.c.l.b16 %v63
    %v212 = vunpack.c.l.b16 %v64
    %v213 = vunpack.c.l.b16 %v65
    %v214 = vunpack.c.l.b16 %v66
    %v215 = vunpack.c.l.b16 %v67
    %v216 = vunpack.c.l.b16 %v68
    %v217 = vunpack.c.l.b16 %v69
    %v218 = vunpack.c.l.b16 %v70
    %v219 = vunpack.c.l.b16 %v71
    %v220 = vunpack.c.l.b16 %v72
    %v221 = vunpack.c.l.b16 %v73
    %v222 = vunpack.c.l.b16 %v74
    %v223 = vunpack.c.l.b16 %v75
    %v224 = vunpack.c.l.b16 %v76
    %v225 = vunpack.c.l.b16 %v77
    %v226 = vunpack.c.l.b16 %v78
    %v227 = vunpack.c.l.b16 %v79
    %v228 = vunpack.c.l.b16 %v80
    %v229 = vunpack.c.l.b16 %v81
    %v230 = vunpack.c.l.b16 %v82
    %v231 = vunpack.c.l.b16 %v83
    %v232 = vunpack.c.l.b16 %v84
    %v233 = vunpack.c.l.b16 %v85
    %v234 = vunpack.c.l.b16 %v86
    %v235 = vunpack.c.l.b16 %v87
    %v236 = vunpack.c.l.b16 %v88
    %v237 = vunpack.c.l.b16 %v89
    %v238 = vunpack.c.l.b16 %v90
    %v239 = vunpack.c.l.b16 %v91
    %v240 = vunpack.c.l.b16 %v92
    %v241 = vunpack.c.l.b16 %v93
    %v242 = vunpack.c.l.b16 %v94
    %v243 = vpack.c.b16 %v212, %v211
    %v244 = vpack.c.b16 %v214, %v213
    %v245 = vpack.c.b16 %v216, %v215
    %v246 = vpack.c.b16 %v218, %v217
    %v247 = vpack.c.b16 %v220, %v219
    %v248 = vpack.c.b16 %v222, %v221
    %v249 = vpack.c.b16 %v224, %v223
    %v250 = vpack.c.b16 %v226, %v225
    %v251 = vpack.c.b16 %v228, %v227
    %v252 = vpack.c.b16 %v230, %v229
    %v253 = vpack.c.b16 %v232, %v231
    %v254 = vpack.c.b16 %v234, %v233
    %v255 = vpack.c.b16 %v236, %v235
    %v256 = vpack.c.b16 %v238, %v237
    %v257 = vpack.c.b16 %v240, %v239
    %v258 = vpack.c.b16 %v242, %v241
    %275 = vmatpush.bf16.msra.mxu0 %v250
    %276 = vmatpush.bf16.msra.mxu0 %v249
    %277 = vmatpush.bf16.msra.mxu0 %v248
    %278 = vmatpush.bf16.msra.mxu0 %v247
    %279 = vmatpush.bf16.msra.mxu0 %v246
    %280 = vmatpush.bf16.msra.mxu0 %v245
    %281 = vmatpush.bf16.msra.mxu0 %v244
    %282 = vmatpush.bf16.msra.mxu0 %v243
    %283 = vmatmul.bf16.gmra.mxu0 %v147
    %v284 = vpop.f32.mrf.mxu0
    %v285 = vadd.f32 %v97, %v284
    %v286 = vpop.f32.mrf.mxu0
    %v287 = vadd.f32 %v97, %v286
    %288 = vmatmul.bf16.gmra.mxu0 %v149
    %v289 = vpop.f32.mrf.mxu0
    %v290 = vadd.f32 %v97, %v289
    %v291 = vpop.f32.mrf.mxu0
    %v292 = vadd.f32 %v97, %v291
    %293 = vmatmul.bf16.gmra.mxu0 %v151
    %v294 = vpop.f32.mrf.mxu0
    %v295 = vadd.f32 %v97, %v294
    %v296 = vpop.f32.mrf.mxu0
    %v297 = vadd.f32 %v97, %v296
    %298 = vmatmul.bf16.gmra.mxu0 %v153
    %v299 = vpop.f32.mrf.mxu0
    %v300 = vadd.f32 %v97, %v299
    %v301 = vpop.f32.mrf.mxu0
    %v302 = vadd.f32 %v97, %v301
    %303 = vmatmul.bf16.gmra.mxu0 %v155
    %v304 = vpop.f32.mrf.mxu0
    %v305 = vadd.f32 %v97, %v304
    %v306 = vpop.f32.mrf.mxu0
    %v307 = vadd.f32 %v97, %v306
    %308 = vmatmul.bf16.gmra.mxu0 %v157
    %v309 = vpop.f32.mrf.mxu0
    %v310 = vadd.f32 %v97, %v309
    %v311 = vpop.f32.mrf.mxu0
    %v312 = vadd.f32 %v97, %v311
    %313 = vmatmul.bf16.gmra.mxu0 %v159
    %v314 = vpop.f32.mrf.mxu0
    %v315 = vadd.f32 %v97, %v314
    %v316 = vpop.f32.mrf.mxu0
    %v317 = vadd.f32 %v97, %v316
    %318 = vmatmul.bf16.gmra.mxu0 %v161
    %v319 = vpop.f32.mrf.mxu0
    %v320 = vadd.f32 %v97, %v319
    %v321 = vpop.f32.mrf.mxu0
    %v322 = vadd.f32 %v97, %v321
    %323 = vdwg.mxu0
    %324 = vmatpush.bf16.msra.mxu0 %v258
    %325 = vmatpush.bf16.msra.mxu0 %v257
    %326 = vmatpush.bf16.msra.mxu0 %v256
    %327 = vmatpush.bf16.msra.mxu0 %v255
    %328 = vmatpush.bf16.msra.mxu0 %v254
    %329 = vmatpush.bf16.msra.mxu0 %v253
    %330 = vmatpush.bf16.msra.mxu0 %v252
    %331 = vmatpush.bf16.msra.mxu0 %v251
    %332 = vmatmul.bf16.gmra.mxu0 %v148
    %v333 = vpop.f32.mrf.mxu0
    %v334 = vadd.f32 %v285, %v333
    %v335 = vpop.f32.mrf.mxu0
    %v336 = vadd.f32 %v287, %v335
    %337 = vmatmul.bf16.gmra.mxu0 %v150
    %v338 = vpop.f32.mrf.mxu0
    %v339 = vadd.f32 %v290, %v338
    %v340 = vpop.f32.mrf.mxu0
    %v341 = vadd.f32 %v292, %v340
    %342 = vmatmul.bf16.gmra.mxu0 %v152
    %v343 = vpop.f32.mrf.mxu0
    %v344 = vadd.f32 %v295, %v343
    %v345 = vpop.f32.mrf.mxu0
    %v346 = vadd.f32 %v297, %v345
    %347 = vmatmul.bf16.gmra.mxu0 %v154
    %v348 = vpop.f32.mrf.mxu0
    %v349 = vadd.f32 %v300, %v348
    %v350 = vpop.f32.mrf.mxu0
    %v351 = vadd.f32 %v302, %v350
    %352 = vmatmul.bf16.gmra.mxu0 %v156
    %v353 = vpop.f32.mrf.mxu0
    %v354 = vadd.f32 %v305, %v353
    %v355 = vpop.f32.mrf.mxu0
    %v356 = vadd.f32 %v307, %v355
    %357 = vmatmul.bf16.gmra.mxu0 %v158
    %v358 = vpop.f32.mrf.mxu0
    %v359 = vadd.f32 %v310, %v358
    %v360 = vpop.f32.mrf.mxu0
    %v361 = vadd.f32 %v312, %v360
    %362 = vmatmul.bf16.gmra.mxu0 %v160
    %v363 = vpop.f32.mrf.mxu0
    %v364 = vadd.f32 %v315, %v363
    %v365 = vpop.f32.mrf.mxu0
    %v366 = vadd.f32 %v317, %v365
    %367 = vmatmul.bf16.gmra.mxu0 %v162
    %v368 = vpop.f32.mrf.mxu0
    %v369 = vadd.f32 %v320, %v368
    %v370 = vpop.f32.mrf.mxu0
    %v371 = vadd.f32 %v322, %v370
    %372 = vdwg.mxu0
    %v373 = vpack.c.bf16 %v334, %v334
    %v374 = vpack.c.bf16 %v336, %v336
    %v375 = vpack.c.bf16 %v339, %v339
    %v376 = vpack.c.bf16 %v341, %v341
    %v377 = vpack.c.bf16 %v344, %v344
    %v378 = vpack.c.bf16 %v346, %v346
    %v379 = vpack.c.bf16 %v349, %v349
    %v380 = vpack.c.bf16 %v351, %v351
    %v381 = vpack.c.bf16 %v354, %v354
    %v382 = vpack.c.bf16 %v356, %v356
    %v383 = vpack.c.bf16 %v359, %v359
    %v384 = vpack.c.bf16 %v361, %v361
    %v385 = vpack.c.bf16 %v364, %v364
    %v386 = vpack.c.bf16 %v366, %v366
    %v387 = vpack.c.bf16 %v369, %v369
    %v388 = vpack.c.bf16 %v371, %v371
    %389 = vst [vmem:[#allocation7] sm:$0xf] %v373
    %390 = vst [vmem:[#allocation7 + $0x4] sm:$0xf] %v374
    %391 = vst [vmem:[#allocation7 + $0x8] sm:$0xf] %v375
    %392 = vst [vmem:[#allocation7 + $0xc] sm:$0xf] %v376
    %393 = vst [vmem:[#allocation7 + $0x10] sm:$0xf] %v377
    %394 = vst [vmem:[#allocation7 + $0x14] sm:$0xf] %v378
    %395 = vst [vmem:[#allocation7 + $0x18] sm:$0xf] %v379
    %396 = vst [vmem:[#allocation7 + $0x1c] sm:$0xf] %v380
    %397 = vst [vmem:[#allocation7 + $0x20] sm:$0xf] %v381
    %398 = vst [vmem:[#allocation7 + $0x24] sm:$0xf] %v382
    %399 = vst [vmem:[#allocation7 + $0x28] sm:$0xf] %v383
    %400 = vst [vmem:[#allocation7 + $0x2c] sm:$0xf] %v384
    %401 = vst [vmem:[#allocation7 + $0x30] sm:$0xf] %v385
    %402 = vst [vmem:[#allocation7 + $0x34] sm:$0xf] %v386
    %403 = vst [vmem:[#allocation7 + $0x38] sm:$0xf] %v387
    %404 = vst [vmem:[#allocation7 + $0x3c] sm:$0xf] %v388
    // Predicated region
    $region22: #{tpu_custom_call.1} parent=1 // pred_check
      _
    $region23: #{tpu_custom_call.1} parent=1 // pred_check_branch
      %406 = sbr.rel (0) target = $region25
    $region24: #{tpu_custom_call.1} parent=1 // pred_region
      %408 = vsyncadd [#allocation4], 0
      %s409 = sshll.u32 [#allocation7], 4
      %s410 = int_to_ptr.vmem [resolvable:$true] %s409
      %s411 = sshll.u32 %s3, 4
      %s412 = int_to_ptr.hbm [resolvable:$true] %s411
      %417 = dma.vmem_to_hbm [thread:$0]  %s410, 1024, %s412, [#allocation4], 64, 64, 4
    $region25: #{tpu_custom_call.1} parent=1 // pred_fallthru
      _
    // Predicated region
    $region26: #{tpu_custom_call.1} parent=1 // pred_check
      _
    $region27: #{tpu_custom_call.1} parent=1 // pred_check_branch
      %419 = sbr.rel (0) target = $region29
    $region28: #{tpu_custom_call.1} parent=1 // pred_region
      %421 = dma.done [#allocation4], 1024
    $region29: #{tpu_custom_call.1} parent=1 // pred_fallthru
      _
    %422 = vsyncpa [#allocation3], 1
    %423 = vsyncpa [#allocation6], 1
    %424 = vsyncpa [#allocation4], 1

</llo_original>
